<compile_context>
chip_gen: v6e
topology: v6e:2x2x1
jax: 0.10.0
libtpu: 0.0.40
codegen_flags: <defaults>
</compile_context>

<pallas_src>
import functools

import jax
import jax.numpy as jnp
from jax import lax
from jax.experimental import pallas as pl
from jax.experimental.pallas import tpu as pltpu


# --------------------------------------------------------------------------- #
# VMEM / tile planning helpers
# --------------------------------------------------------------------------- #
def _round_up(x, q):
    return ((x + q - 1) // q) * q


def _divisors(n):
    out = []
    i = 1
    while i * i <= n:
        if n % i == 0:
            out.append(i)
            if i != n // i:
                out.append(n // i)
        i += 1
    return sorted(out)


def _tile_candidates(full, quantum):
    """Divisors of `full` satisfying the (8,128) block rule along one axis:
    a multiple of `quantum`, or the full extent itself.  Descending order."""
    cands = {full}
    for d in _divisors(full):
        if d % quantum == 0:
            cands.add(d)
    return sorted(cands, reverse=True)


def _vmem_plan():
    """Generation-aware VMEM budgeting.  Defaults are v7x-safe (64 MiB physical
    VMEM per TC, 2 TensorCores) if the hardware query is unavailable."""
    vmem_cap = 64 * 2**20
    n_cores = 2
    try:
        info = pltpu.get_tpu_info()
        vmem_cap = int(getattr(info, "vmem_capacity_bytes", vmem_cap))
        for name in ("num_cores", "core_count", "num_tensorcores", "tensorcore_count"):
            v = getattr(info, name, None)
            if v:
                n_cores = int(v)
                break
    except Exception:
        pass
    # ~75% of physical VMEM, capped at 96 MiB (v5e/v6e) -> ~48 MiB on v7x.
    vmem_limit = min((vmem_cap * 3) // 4, 96 * 2**20)
    reserve = 4 * 2**20  # weights, tiny outputs/accumulators, internal scratch headroom
    # Per-buffer budget for the double-buffered feats stream; >=512-wide tiles already
    # reach ~85% of HBM roofline, so cap at 32 MiB and keep slack.
    block_budget = max(min((vmem_limit - reserve) // 2, 32 * 2**20), 1 * 2**20)
    return vmem_limit, reserve, block_budget, max(int(n_cores), 1)


def _choose_tiles_2d(R, HW, budget, min_par_blocks):
    """Block (tR, tHW) for the [R, HW] = [B*C, HW] fold.  Prefer the largest tHW
    (longest contiguous DMA rows, fewest grid steps; ideally tHW == HW), then the
    largest tR under the padded-byte budget; prefer >= min_par_blocks row tiles."""
    r_cands = _tile_candidates(R, 8)
    hw_cands = _tile_candidates(HW, 128)
    split = [t for t in r_cands if R // t >= min_par_blocks]
    if split:
        r_cands = split
    for thw in hw_cands:
        for tr in r_cands:
            if _round_up(tr, 8) * _round_up(thw, 128) * 4 <= budget:
                return tr, thw
    return r_cands[-1], hw_cands[-1]  # nothing fits: smallest legal block


def _choose_tiles_3d(B, C, HW, budget, min_par_blocks):
    """Block (tB, C, tHW) for the [B, C, HW] layout (C >= 8, sublane-dense)."""
    b_cands = _tile_candidates(B, 1)
    hw_cands = _tile_candidates(HW, 128)
    split = [t for t in b_cands if B // t >= min_par_blocks]
    if split:
        b_cands = split
    for thw in hw_cands:
        for tb in b_cands:
            if tb * _round_up(C, 8) * _round_up(thw, 128) * 4 <= budget:
                return tb, thw
    return b_cands[-1], hw_cands[-1]


# --------------------------------------------------------------------------- #
# Kernels
# --------------------------------------------------------------------------- #
def _pool_sum_kernel(x_ref, out_ref):
    """2D-fold path (C < 8).  Grid = (row_tiles, hw_chunks); hw chunk axis last
    ("arbitrary").  The output block itself is the accumulator (its index map is
    constant along k, so it stays resident and is written back once per row tile)."""
    @pl.when(pl.program_id(1) == 0)
    def _init():
        out_ref[...] = jnp.zeros_like(out_ref)

    # One XLU row-reduce per freshly DMA'd tile; hides under the next tile's DMA.
    out_ref[...] += jnp.sum(x_ref[...], axis=-1, keepdims=True)


def _moe_gate3d_kernel(feats_ref, w_ref, idx_ref, acc_ref, *, inv_hw):
    """3D path (C >= 8).  Grid = (B_tiles, hw_chunks).  Slim (tB, C, 1) accumulator;
    projection + argmax run once per B-tile in the finalize branch (index-only out)."""
    k = pl.program_id(1)
    nk = pl.num_programs(1)

    @pl.when(k == 0)
    def _init():
        acc_ref[...] = jnp.zeros_like(acc_ref)

    acc_ref[...] += jnp.sum(feats_ref[...], axis=-1, keepdims=True)

    @pl.when(k == nk - 1)
    def _finalize():
        pooled = acc_ref[...][:, :, 0] * inv_hw            # [tB, C] mean (sum * 1/HW)
        logits = jnp.dot(pooled, w_ref[...],
                         preferred_element_type=jnp.float32)  # [tB, M]
        tB, M = logits.shape
        # top-1 argmax with first-index tie-break (matches jnp.argmax; best effort
        # vs torch.topk tie ordering).
        col = lax.broadcasted_iota(jnp.int32, (tB, M), 1)
        max_val = jnp.max(logits, axis=1, keepdims=True)
        masked_col = jnp.where(logits == max_val, col, M)
        # NOTE: (tB, 1) int32 writeback is a masked lane-1 store — B ints total,
        # review marks a lane-dense alternative as low priority.
        idx_ref[...] = jnp.min(masked_col, axis=1, keepdims=True).astype(jnp.int32)


# --------------------------------------------------------------------------- #
# Forward wrapper
# --------------------------------------------------------------------------- #
def _gates_and_loss(top_idx, M, loss_coef):
    gates = jax.nn.one_hot(top_idx, M, dtype=jnp.float32)            # [B, M]

    def cv_squared(x):
        eps = 1e-10
        if x.shape[0] == 1:
            return jnp.zeros((), x.dtype)
        return jnp.var(x, ddof=1) / (jnp.mean(x) ** 2 + eps)         # torch .var() is unbiased

    importance = gates.sum(axis=0)                                   # [M]
    load = (gates > 0).sum(axis=0).astype(jnp.float32)               # [M]
    loss = (cv_squared(importance) + cv_squared(load)) * loss_coef
    return gates, loss


def moe_gate_forward(feats_nchw, w_gate, loss_coef=0.01):
    """feats_nchw: [B, C, H, W] float32; w_gate: [C, M] float32. Returns (gates, loss)."""
    B, C, H, W = feats_nchw.shape
    M = w_gate.shape[1]
    HW = H * W

    vmem_limit, reserve, block_budget, n_cores = _vmem_plan()
    min_par_blocks = max(n_cores, 1)

    if C < 8:
        # ---- sublane-dense 2D fold: pool-only kernel, tiny gate math in JAX ----
        R = B * C
        feats2d = feats_nchw.reshape(R, HW).astype(jnp.float32)
        tR, tHW = _choose_tiles_2d(R, HW, block_budget, min_par_blocks)
        nR, nk = R // tR, HW // tHW
        blk_bytes = _round_up(tR, 8) * _round_up(tHW, 128) * 4
        vmem_limit_eff = max(vmem_limit, 2 * blk_bytes + reserve)

        grid_spec = pltpu.PrefetchScalarGridSpec(
            num_scalar_prefetch=0,
            grid=(nR, nk),
            in_specs=[pl.BlockSpec((tR, tHW), lambda r, k: (r, k))],
            out_specs=pl.BlockSpec((tR, 1), lambda r, k: (r, 0)),
        )
        cost = pl.CostEstimate(
            flops=int(R * HW),
            transcendentals=0,
            bytes_accessed=int(R * HW * 4 + R * 4),
        )
        sums = pl.pallas_call(
            _pool_sum_kernel,
            out_shape=jax.ShapeDtypeStruct((R, 1), jnp.float32),
            grid_spec=grid_spec,
            compiler_params=pltpu.CompilerParams(
                dimension_semantics=("parallel", "arbitrary"),
                vmem_limit_bytes=vmem_limit_eff,
            ),
            cost_estimate=cost,
        )(feats2d)

        feats_s = sums.reshape(B, C) / jnp.float32(HW)               # mean over H,W
        logits = feats_s @ w_gate.astype(jnp.float32)                # tiny: B*C*M flops
        top_idx = jnp.argmax(logits, axis=1)
    else:
        # ---- 3D path: in-kernel projection + argmax, index-only output ----
        feats3d = feats_nchw.reshape(B, C, HW).astype(jnp.float32)
        tB, tHW = _choose_tiles_3d(B, C, HW, block_budget, min_par_blocks)
        nb, nk = B // tB, HW // tHW
        blk_bytes = tB * _round_up(C, 8) * _round_up(tHW, 128) * 4
        vmem_limit_eff = max(vmem_limit, 2 * blk_bytes + reserve)

        grid_spec = pltpu.PrefetchScalarGridSpec(
            num_scalar_prefetch=0,
            grid=(nb, nk),
            in_specs=[
                pl.BlockSpec((tB, C, tHW), lambda b, k: (b, 0, k)),
                pl.BlockSpec((C, M), lambda b, k: (0, 0)),           # tiny, resident
            ],
            out_specs=pl.BlockSpec((tB, 1), lambda b, k: (b, 0)),
            scratch_shapes=[pltpu.VMEM((tB, C, 1), jnp.float32)],    # slim accumulator
        )
        cost = pl.CostEstimate(
            flops=int(B * C * HW + 2 * B * C * M),
            transcendentals=0,
            bytes_accessed=int(B * C * HW * 4 + C * M * 4 + B * 4),
        )
        top_idx2d = pl.pallas_call(
            functools.partial(_moe_gate3d_kernel, inv_hw=float(1.0 / HW)),
            out_shape=jax.ShapeDtypeStruct((B, 1), jnp.int32),
            grid_spec=grid_spec,
            compiler_params=pltpu.CompilerParams(
                dimension_semantics=("parallel", "arbitrary"),
                vmem_limit_bytes=vmem_limit_eff,
            ),
            cost_estimate=cost,
        )(feats3d, w_gate.astype(jnp.float32))
        top_idx = top_idx2d[:, 0]

    return _gates_and_loss(top_idx, M, loss_coef)


# --------------------------------------------------------------------------- #
# Pure-JAX reference (mirrors the PyTorch eval-mode forward)
# --------------------------------------------------------------------------- #
def moe_gate_reference(feats_nchw, w_gate, loss_coef=0.01):
    M = w_gate.shape[1]
    feats_s = feats_nchw.mean(axis=(2, 3))                # [B, C]
    logits = feats_s @ w_gate                             # [B, M]
    top_idx = jnp.argmax(logits, axis=1)                  # k=1 -> top-1
    gates = jax.nn.one_hot(top_idx, M, dtype=jnp.float32)

    def cv_squared(x):
        eps = 1e-10
        if x.shape[0] == 1:
            return jnp.zeros((), x.dtype)
        return jnp.var(x, ddof=1) / (jnp.mean(x) ** 2 + eps)

    importance = gates.sum(axis=0)
    load = (gates > 0).sum(axis=0).astype(jnp.float32)
    loss = (cv_squared(importance) + cv_squared(load)) * loss_coef
    return gates, loss


if __name__ == "__main__":
    key = jax.random.PRNGKey(0)

    # --- Test 1: the module's own configuration MoEGate(d=4, M=4, K=1) ---------
    # feats: [B=2, C=d=4, H=16, W=16]  -> C < 8 -> sublane-dense 2D-fold path.
    B, d, H, W, M = 2, 4, 16, 16, 4
    k1, k2, key = jax.random.split(key, 3)
    feats = jax.random.normal(k1, (B, d, H, W), dtype=jnp.float32)
    # The module initializes w_gate to zeros (degenerate: all-equal logits); use a
    # small deterministic random init of the same shape so the gate path is exercised.
    w_gate = 0.02 * jax.random.normal(k2, (d, M), dtype=jnp.float32)

    gates, loss = moe_gate_forward(feats, w_gate)
    gates, loss = jax.block_until_ready((gates, loss))
    gates_ref, loss_ref = moe_gate_reference(feats, w_gate)
    assert gates.shape == (B, M) and gates.dtype == jnp.float32
    assert jnp.allclose(gates, gates_ref, atol=1e-6), (gates, gates_ref)
    assert jnp.allclose(loss, loss_ref, atol=1e-6), (loss, loss_ref)

    # --- Test 2: larger channel count -> fused 3D path (in-kernel gate) --------
    B2, C2, H2, W2, M2 = 4, 32, 32, 32, 4
    k3, k4, _ = jax.random.split(key, 3)
    feats2 = jax.random.normal(k3, (B2, C2, H2, W2), dtype=jnp.float32)
    w_gate2 = 0.02 * jax.random.normal(k4, (C2, M2), dtype=jnp.float32)

    gates2, loss2 = moe_gate_forward(feats2, w_gate2)
    gates2, loss2 = jax.block_until_ready((gates2, loss2))
    gates2_ref, loss2_ref = moe_gate_reference(feats2, w_gate2)
    assert jnp.allclose(gates2, gates2_ref, atol=1e-6), (gates2, gates2_ref)
    assert jnp.allclose(loss2, loss2_ref, atol=1e-6), (loss2, loss2_ref)

    print("KERNEL_OK")
</pallas_src>

<mosaic_0001>
module attributes {stable_mosaic.version = 11 : i64} {
  func.func @_pool_sum_kernel(%arg0: i32, %arg1: i32, %arg2: memref<8x256xf32, #tpu.memory_space<vmem>>, %arg3: memref<8x1xf32, #tpu.memory_space<vmem>>) attributes {dimension_semantics = [#tpu.dimension_semantics<parallel>, #tpu.dimension_semantics<arbitrary>], iteration_bounds = array<i64: 1, 1>, scalar_prefetch = 0 : i64, scratch_operands = 0 : i64, tpu.core_type = #tpu.core_type<tc>, window_params = [{transform_indices = @transform_0, window_bounds = array<i64: 8, 256>}, {transform_indices = @transform_1, window_bounds = array<i64: 8, 1>}]} {
    %c0_i32 = arith.constant 0 : i32
    %0 = arith.cmpi eq, %arg1, %c0_i32 : i32
    %1 = arith.extui %0 : i1 to i32
    %c0_i32_0 = arith.constant 0 : i32
    %2 = arith.cmpi ne, %1, %c0_i32_0 : i32
    scf.if %2 {
      %cst_6 = arith.constant 0.000000e+00 : f32
      %9 = vector.broadcast %cst_6 : f32 to vector<8x1xf32>
      %c0_7 = arith.constant 0 : index
      %c0_8 = arith.constant 0 : index
      %10 = vector.load %arg3[%c0_7, %c0_8] : memref<8x1xf32, #tpu.memory_space<vmem>>, vector<8x1xf32>
      tpu.vector_store %arg3[%c0_7, %c0_8], %9 {strides = array<i32>} : memref<8x1xf32, #tpu.memory_space<vmem>>, vector<8x1xf32>,
    } else {
    }
    %c0 = arith.constant 0 : index
    %c0_1 = arith.constant 0 : index
    %3 = vector.load %arg3[%c0, %c0_1] : memref<8x1xf32, #tpu.memory_space<vmem>>, vector<8x1xf32>
    %c0_2 = arith.constant 0 : index
    %c0_3 = arith.constant 0 : index
    %4 = vector.load %arg2[%c0_2, %c0_3] : memref<8x256xf32, #tpu.memory_space<vmem>>, vector<8x256xf32>
    %cst = arith.constant dense<0.000000e+00> : vector<8xf32>
    %5 = vector.multi_reduction <add>, %4, %cst [1] : vector<8x256xf32> to vector<8xf32>
    %6 = vector.shape_cast %5 : vector<8xf32> to vector<8x1xf32>
    %7 = arith.addf %3, %6 : vector<8x1xf32>
    %c0_4 = arith.constant 0 : index
    %c0_5 = arith.constant 0 : index
    %8 = vector.load %arg3[%c0_4, %c0_5] : memref<8x1xf32, #tpu.memory_space<vmem>>, vector<8x1xf32>
    tpu.vector_store %arg3[%c0_4, %c0_5], %7 {strides = array<i32>} : memref<8x1xf32, #tpu.memory_space<vmem>>, vector<8x1xf32>,
    return
  }
  func.func @transform_0(%arg0: i32, %arg1: i32) -> (i32, i32) {
    %c0_i32 = arith.constant 0 : i32
    return %arg0, %arg1 : i32, i32
  }
  func.func @transform_1(%arg0: i32, %arg1: i32) -> (i32, i32) {
    %c0_i32 = arith.constant 0 : i32
    %c0_i32_0 = arith.constant 0 : i32
    return %arg0, %c0_i32 : i32, i32
  }
}

</mosaic_0001>

<llo_original>
// kernel: tpu_custom_call.1
$region0: #{tpu_custom_call.1}
  #allocation0 [shape = 'u32[]', space=smem, size = 0x4, offset = 0x4, fixed_abs, tag = 'smem constant byte address 0x4 - core index']
  #allocation1 [shape = 'u32[144,128]{1,0:T(1,128)}', space=vmem, size = 0x12000, scoped, tag = 'internal scratch']
  %s0 = inlined_call_operand.hbm [shape: f32[8,256], index: 0, kind: input, shape index: {}]
  %s1 = inlined_call_operand.vmem [shape: f32[8,1], index: 1, kind: output, shape index: {}]
  %s2 = sld [smem:[#allocation0]]
  $region22: #{tpu_custom_call.1} parent=0
    _
  %s4 = ssub.s32 1, %s2
  %s5 = scalar_select 0, %s4, %s2
  $region1: #{tpu_custom_call.1} parent=0
    #allocation2 [shape = 'u8[8192]{0}', space=vmem, size = 0x2000, scoped, tag = 'input window, operand 0, single buffered']
    #allocation3 [shape = 's32[1]{0}', space=sflag, size = 0x4, scoped, tag = 'scoped memory for tpu_custom_call.1']
    %6 = vsyncpa [#allocation3], 0
    // Predicated region
    $region2: #{tpu_custom_call.1} parent=1 // pred_check
      _
    $region3: #{tpu_custom_call.1} parent=1 // pred_check_branch
      %8 = sbr.rel (0) target = $region5
    $region4: #{tpu_custom_call.1} parent=1 // pred_region
      %s10 = ssub.s32 256, 256
      %11 = vsyncadd [#allocation3], %s10
      %s13 = sshll.u32 [#allocation2], 4
      %s14 = int_to_ptr.vmem [resolvable:$true] %s13
      %16 = dma.hbm_to_vmem [thread:$0]  %s0, 256, %s14, [#allocation3]
    $region5: #{tpu_custom_call.1} parent=1 // pred_fallthru
      _
    // Predicated region
    $region6: #{tpu_custom_call.1} parent=1 // pred_check
      _
    $region7: #{tpu_custom_call.1} parent=1 // pred_check_branch
      %18 = sbr.rel (0) target = $region9
    $region8: #{tpu_custom_call.1} parent=1 // pred_region
      %19 = dma.done [#allocation3], 256
    $region9: #{tpu_custom_call.1} parent=1 // pred_fallthru
      _
    %p20 = scmp.eq.s32.totalorder 0, 0
    // Predicated region
    $region10: #{tpu_custom_call.1} parent=1 // pred_check
      %p21 = pneg %p20
    $region11: #{tpu_custom_call.1} parent=1 // pred_check_branch
      %23 = sbr.rel (%p21) target = $region13
    $region12: #{tpu_custom_call.1} parent=1 // pred_region
      %vm24 = vcmask 7168
      %25 = vst.msk [vmem:[%s1] sm:$0xff] %vm24, 0.0
    $region13: #{tpu_custom_call.1} parent=1 // pred_fallthru
      _
    %v26 = vld [vmem:[%s1] sm:$0xff]
    %v27 = vld [vmem:[#allocation2] sm:$0xff]
    %v28 = vld [vmem:[#allocation2 + $0x8] sm:$0xff]
    %v29 = vadd.f32 %v27, %v28
    %30 = vadd.xlane.f32.xlu0 %v29
    %v31 = vpop.xlane.xlu0 %30
    %v32 = vadd.f32 %v26, %v31
    %vm33 = vcmask 7168
    %34 = vst.msk [vmem:[%s1] sm:$0xff] %vm33, %v32
    // Predicated region
    $region14: #{tpu_custom_call.1} parent=1 // pred_check
      _
    $region15: #{tpu_custom_call.1} parent=1 // pred_check_branch
      %36 = sbr.rel (0) target = $region17
    $region16: #{tpu_custom_call.1} parent=1 // pred_region
      _
    $region17: #{tpu_custom_call.1} parent=1 // pred_fallthru
      _
    // Predicated region
    $region18: #{tpu_custom_call.1} parent=1 // pred_check
      _
    $region19: #{tpu_custom_call.1} parent=1 // pred_check_branch
      %38 = sbr.rel (0) target = $region21
    $region20: #{tpu_custom_call.1} parent=1 // pred_region
      _
    $region21: #{tpu_custom_call.1} parent=1 // pred_fallthru
      _
    %39 = vsyncpa [#allocation3], 1

</llo_original>
